<compile_context>
chip_gen: v7x
topology: tpu7x:2x2x1
jax: 0.10.0
libtpu: 0.0.40
codegen_flags: <defaults>
</compile_context>

<pallas_src>
import math

import jax
import jax.numpy as jnp
from jax.experimental import pallas as pl
from jax.experimental.pallas import tpu as pltpu


def _adaptive_relu_kernel(x_ref, ch_ref, w_ref, b_ref, o_ref):
    # x_ref:  (TB, P, F_in)       this step's batch of tiles
    # ch_ref: (TB, 1, 1) int32    per-tile channel id
    # w_ref:  (C, F_in, F_out)    full weight, VMEM-resident
    # b_ref:  (1, F_out)          bias, VMEM-resident
    # o_ref:  (TB, P, F_out)
    tb, p, f_in = x_ref.shape
    c_channels = w_ref.shape[0]
    f_out = o_ref.shape[-1]

    # Flatten tiles into the matmul M dimension. Layout-preserving when P % 8 == 0
    # (P maps onto whole sublane tiles), so this is free at these shapes.
    x2 = x_ref[...].reshape(tb * p, f_in)
    ch = ch_ref[...]                                   # (TB, 1, 1)

    # Dense over the (small) channel count: one full-height MXU matmul per channel,
    # then a broadcasted per-tile mask picks the right channel.  C*extra FLOPs are
    # negligible at F_in=F_out=32 and this removes all per-tile matmuls / gathers.
    acc = None
    for c in range(c_channels):                        # static unroll, C is small
        y = jnp.dot(x2, w_ref[c],                      # (TB*P, F_in) @ (F_in, F_out) on MXU
                    preferred_element_type=jnp.float32).reshape(tb, p, f_out)
        m = (ch == c).astype(jnp.float32)              # (TB, 1, 1) selection mask
        term = m * y
        acc = term if acc is None else acc + term

    acc = acc + b_ref[...]                             # bias broadcast, once per step
    o_ref[...] = jnp.maximum(acc, 0.2 * acc).astype(o_ref.dtype)   # LeakyReLU(0.2)


def _resident_spec(block_shape, index_map):
    """Constant-index (VMEM-resident) input: single-buffered when supported."""
    try:
        return pl.BlockSpec(block_shape, index_map, pipeline_mode=pl.Buffered(1))
    except TypeError:  # older Pallas without pipeline_mode -> default double buffer
        return pl.BlockSpec(block_shape, index_map)


def adaptive_relu_layer(x, indices, weight, bias, *, tiles_per_step=128):
    """x: (T, P, F_in) f32, indices: (T,) int, weight: (C, F_in, F_out) f32,
    bias: (1, 1, F_out) f32  ->  (T, P, F_out) f32."""
    T, P, F_in = x.shape
    C, _, F_out = weight.shape

    # Per-tile channel ids as a (T, 1, 1) vector input (leading-dim scalars broadcast
    # cleanly over (P, F_out) inside the kernel).  Clamp: the in-kernel selection has no
    # bounds check (PyTorch would raise on out-of-range indices).
    ch = jnp.clip(indices.astype(jnp.int32), 0, C - 1).reshape(T, 1, 1)
    b2 = bias.reshape(1, F_out)

    # ---- tile-batch (grid step) sizing -------------------------------------------
    # * >= 2 grid steps whenever T >= 2 so dimension_semantics=("parallel",) can
    #   actually split work across v7x's two TensorCores.
    # * VMEM budget: double-buffered (x block + out block + lane-padded ch block)
    #   plus the resident weight/bias, kept well under the 32 MiB scoped limit.
    TB = max(1, min(tiles_per_step, pl.cdiv(T, 2)))
    per_tile_bytes = 4 * P * (F_in + F_out) + 8 * 128 * 4      # x + out + padded ch tile
    resident_bytes = 4 * (C * F_in * F_out + F_out)
    budget = 16 * 1024 * 1024
    TB = max(1, min(TB, (budget - resident_bytes) // (2 * per_tile_bytes)))
    grid = (pl.cdiv(T, TB),)                                    # tail block masked by Pallas

    cost = pl.CostEstimate(
        flops=2 * grid[0] * TB * P * F_in * F_out * C,          # dense over C channels
        transcendentals=0,
        bytes_accessed=4 * (T * P * F_in + T * P * F_out + C * F_in * F_out + F_out + T),
    )

    grid_spec = pltpu.PrefetchScalarGridSpec(
        num_scalar_prefetch=0,
        grid=grid,
        in_specs=[
            # batch of TB tiles per step (no HBM pad of x; partial tail block is masked)
            pl.BlockSpec((TB, P, F_in), lambda g: (g, 0, 0)),
            # per-tile channel ids for this step
            pl.BlockSpec((TB, 1, 1), lambda g: (g, 0, 0)),
            # full weight / bias: constant index map -> DMA'd once, single-buffered
            _resident_spec((C, F_in, F_out), lambda g: (0, 0, 0)),
            _resident_spec((1, F_out), lambda g: (0, 0)),
        ],
        # exact (unpadded) output shape; masked stores for F_out<128 beat 4x padded HBM
        # writes + a wrapper slice pass (per review).
        out_specs=pl.BlockSpec((TB, P, F_out), lambda g: (g, 0, 0)),
    )

    out = pl.pallas_call(
        _adaptive_relu_kernel,
        out_shape=jax.ShapeDtypeStruct((T, P, F_out), x.dtype),
        grid_spec=grid_spec,
        compiler_params=pltpu.CompilerParams(
            dimension_semantics=("parallel",),       # independent steps -> v7x dual-TC
            vmem_limit_bytes=32 * 1024 * 1024,       # v5e default scoped VMEM is only 16 MiB
        ),
        cost_estimate=cost,
    )(x, ch, weight, b2)
    return out


def reference(x, indices, weight, bias):
    w = weight[indices]                                  # (T, F_in, F_out)
    out = jnp.einsum("tpi,tio->tpo", x, w) + bias[0]
    return jnp.where(out > 0, out, 0.2 * out)


if __name__ == "__main__":
    key = jax.random.PRNGKey(0)
    k_x, k_w, k_b, k_i, k_x2, k_i2 = jax.random.split(key, 6)

    # Small shapes consistent with the module.
    in_features, out_features, n_channels = 32, 32, 4
    T, P = 2, 16                                         # tiles (bmm batch), points per tile

    x = jax.random.normal(k_x, (T, P, in_features), dtype=jnp.float32)
    indices = jax.random.randint(k_i, (T,), 0, n_channels, dtype=jnp.int32)

    # Kaiming-uniform-style weight init (matches torch's fan-in for the 3-D param);
    # a small non-zero bias so the bias path is actually exercised.
    fan_in = in_features * out_features
    bound = math.sqrt(2.0) * math.sqrt(3.0 / fan_in)
    weight = jax.random.uniform(
        k_w, (n_channels, in_features, out_features),
        minval=-bound, maxval=bound, dtype=jnp.float32)
    bias = 0.1 * jax.random.normal(k_b, (1, 1, out_features), dtype=jnp.float32)

    out = jax.block_until_ready(adaptive_relu_layer(x, indices, weight, bias))
    ref = reference(x, indices, weight, bias)
    assert out.shape == (T, P, out_features)
    assert jnp.allclose(out, ref, atol=1e-5, rtol=1e-5)

    # T not divisible by the tile batch: exercises the masked partial tail block
    # (no jnp.pad of x, no padded output).
    T2 = 13
    x2 = jax.random.normal(k_x2, (T2, P, in_features), dtype=jnp.float32)
    indices2 = jax.random.randint(k_i2, (T2,), 0, n_channels, dtype=jnp.int32)
    out2 = jax.block_until_ready(adaptive_relu_layer(x2, indices2, weight, bias))
    ref2 = reference(x2, indices2, weight, bias)
    assert out2.shape == (T2, P, out_features)
    assert jnp.allclose(out2, ref2, atol=1e-5, rtol=1e-5)

    # Explicit small tile batch: several grid steps + partial tail block.
    out3 = jax.block_until_ready(
        adaptive_relu_layer(x2, indices2, weight, bias, tiles_per_step=3))
    assert jnp.allclose(out3, ref2, atol=1e-5, rtol=1e-5)

    # TODO(synk): the flex=True list-of-ragged-tensors path has no single-kernel
    # equivalent; it would be a Python loop of this kernel over variable-length tiles.
    print("KERNEL_OK")
</pallas_src>

<mosaic_0001>
module attributes {stable_mosaic.version = 11 : i64} {
  func.func @_adaptive_relu_kernel(%arg0: i32, %arg1: memref<1x16x32xf32, #tpu.memory_space<vmem>>, %arg2: memref<1x1x1xi32, #tpu.memory_space<vmem>>, %arg3: memref<4x32x32xf32, #tpu.memory_space<vmem>>, %arg4: memref<1x32xf32, #tpu.memory_space<vmem>>, %arg5: memref<1x16x32xf32, #tpu.memory_space<vmem>>) attributes {dimension_semantics = [#tpu.dimension_semantics<parallel>], iteration_bounds = array<i64: 2>, scalar_prefetch = 0 : i64, scratch_operands = 0 : i64, tpu.core_type = #tpu.core_type<tc>, window_params = [{transform_indices = @transform_0, window_bounds = array<i64: 1, 16, 32>}, {transform_indices = @transform_1, window_bounds = array<i64: 1, 1, 1>}, {pipeline_mode = #tpu.pipeline_mode<synchronous>, transform_indices = @transform_2, window_bounds = array<i64: 4, 32, 32>}, {pipeline_mode = #tpu.pipeline_mode<synchronous>, transform_indices = @transform_3, window_bounds = array<i64: 1, 32>}, {transform_indices = @transform_4, window_bounds = array<i64: 1, 16, 32>}]} {
    %c0 = arith.constant 0 : index
    %c0_0 = arith.constant 0 : index
    %c0_1 = arith.constant 0 : index
    %0 = vector.load %arg1[%c0, %c0_0, %c0_1] : memref<1x16x32xf32, #tpu.memory_space<vmem>>, vector<1x16x32xf32>
    %1 = vector.shape_cast %0 : vector<1x16x32xf32> to vector<16x32xf32>
    %c0_2 = arith.constant 0 : index
    %c0_3 = arith.constant 0 : index
    %c0_4 = arith.constant 0 : index
    %2 = vector.load %arg2[%c0_2, %c0_3, %c0_4] : memref<1x1x1xi32, #tpu.memory_space<vmem>>, vector<1x1x1xi32>
    %c0_5 = arith.constant 0 : index
    %c0_6 = arith.constant 0 : index
    %c0_7 = arith.constant 0 : index
    %3 = vector.load %arg3[%c0_5, %c0_6, %c0_7] : memref<4x32x32xf32, #tpu.memory_space<vmem>>, vector<1x32x32xf32>
    %4 = vector.shape_cast %3 : vector<1x32x32xf32> to vector<32x32xf32>
    %cst = arith.constant dense<0.000000e+00> : vector<16x32xf32>
    %5 = tpu.matmul %1, %4, %cst {dimension_numbers = #tpu.dot_dimension_numbers<[1], [0], [0], [1], [0, 0, 1, 1], [], []>} : vector<16x32xf32>, vector<32x32xf32>, vector<16x32xf32> -> vector<16x32xf32>
    %6 = vector.shape_cast %5 : vector<16x32xf32> to vector<1x16x32xf32>
    %c0_i32 = arith.constant 0 : i32
    %7 = vector.broadcast %c0_i32 : i32 to vector<1x1x1xi32>
    %8 = arith.cmpi eq, %2, %7 : vector<1x1x1xi32>
    %9 = arith.extui %8 : vector<1x1x1xi1> to vector<1x1x1xi32>
    %10 = arith.sitofp %9 : vector<1x1x1xi32> to vector<1x1x1xf32>
    %11 = vector.broadcast %10 : vector<1x1x1xf32> to vector<1x16x32xf32>
    %12 = arith.mulf %11, %6 : vector<1x16x32xf32>
    %c1 = arith.constant 1 : index
    %c0_8 = arith.constant 0 : index
    %c0_9 = arith.constant 0 : index
    %13 = vector.load %arg3[%c1, %c0_8, %c0_9] : memref<4x32x32xf32, #tpu.memory_space<vmem>>, vector<1x32x32xf32>
    %14 = vector.shape_cast %13 : vector<1x32x32xf32> to vector<32x32xf32>
    %cst_10 = arith.constant dense<0.000000e+00> : vector<16x32xf32>
    %15 = tpu.matmul %1, %14, %cst_10 {dimension_numbers = #tpu.dot_dimension_numbers<[1], [0], [0], [1], [0, 0, 1, 1], [], []>} : vector<16x32xf32>, vector<32x32xf32>, vector<16x32xf32> -> vector<16x32xf32>
    %16 = vector.shape_cast %15 : vector<16x32xf32> to vector<1x16x32xf32>
    %c1_i32 = arith.constant 1 : i32
    %17 = vector.broadcast %c1_i32 : i32 to vector<1x1x1xi32>
    %18 = arith.cmpi eq, %2, %17 : vector<1x1x1xi32>
    %19 = arith.extui %18 : vector<1x1x1xi1> to vector<1x1x1xi32>
    %20 = arith.sitofp %19 : vector<1x1x1xi32> to vector<1x1x1xf32>
    %21 = vector.broadcast %20 : vector<1x1x1xf32> to vector<1x16x32xf32>
    %22 = arith.mulf %21, %16 : vector<1x16x32xf32>
    %23 = arith.addf %12, %22 : vector<1x16x32xf32>
    %c2 = arith.constant 2 : index
    %c0_11 = arith.constant 0 : index
    %c0_12 = arith.constant 0 : index
    %24 = vector.load %arg3[%c2, %c0_11, %c0_12] : memref<4x32x32xf32, #tpu.memory_space<vmem>>, vector<1x32x32xf32>
    %25 = vector.shape_cast %24 : vector<1x32x32xf32> to vector<32x32xf32>
    %cst_13 = arith.constant dense<0.000000e+00> : vector<16x32xf32>
    %26 = tpu.matmul %1, %25, %cst_13 {dimension_numbers = #tpu.dot_dimension_numbers<[1], [0], [0], [1], [0, 0, 1, 1], [], []>} : vector<16x32xf32>, vector<32x32xf32>, vector<16x32xf32> -> vector<16x32xf32>
    %27 = vector.shape_cast %26 : vector<16x32xf32> to vector<1x16x32xf32>
    %c2_i32 = arith.constant 2 : i32
    %28 = vector.broadcast %c2_i32 : i32 to vector<1x1x1xi32>
    %29 = arith.cmpi eq, %2, %28 : vector<1x1x1xi32>
    %30 = arith.extui %29 : vector<1x1x1xi1> to vector<1x1x1xi32>
    %31 = arith.sitofp %30 : vector<1x1x1xi32> to vector<1x1x1xf32>
    %32 = vector.broadcast %31 : vector<1x1x1xf32> to vector<1x16x32xf32>
    %33 = arith.mulf %32, %27 : vector<1x16x32xf32>
    %34 = arith.addf %23, %33 : vector<1x16x32xf32>
    %c3 = arith.constant 3 : index
    %c0_14 = arith.constant 0 : index
    %c0_15 = arith.constant 0 : index
    %35 = vector.load %arg3[%c3, %c0_14, %c0_15] : memref<4x32x32xf32, #tpu.memory_space<vmem>>, vector<1x32x32xf32>
    %36 = vector.shape_cast %35 : vector<1x32x32xf32> to vector<32x32xf32>
    %cst_16 = arith.constant dense<0.000000e+00> : vector<16x32xf32>
    %37 = tpu.matmul %1, %36, %cst_16 {dimension_numbers = #tpu.dot_dimension_numbers<[1], [0], [0], [1], [0, 0, 1, 1], [], []>} : vector<16x32xf32>, vector<32x32xf32>, vector<16x32xf32> -> vector<16x32xf32>
    %38 = vector.shape_cast %37 : vector<16x32xf32> to vector<1x16x32xf32>
    %c3_i32 = arith.constant 3 : i32
    %39 = vector.broadcast %c3_i32 : i32 to vector<1x1x1xi32>
    %40 = arith.cmpi eq, %2, %39 : vector<1x1x1xi32>
    %41 = arith.extui %40 : vector<1x1x1xi1> to vector<1x1x1xi32>
    %42 = arith.sitofp %41 : vector<1x1x1xi32> to vector<1x1x1xf32>
    %43 = vector.broadcast %42 : vector<1x1x1xf32> to vector<1x16x32xf32>
    %44 = arith.mulf %43, %38 : vector<1x16x32xf32>
    %45 = arith.addf %34, %44 : vector<1x16x32xf32>
    %c0_17 = arith.constant 0 : index
    %c0_18 = arith.constant 0 : index
    %46 = vector.load %arg4[%c0_17, %c0_18] : memref<1x32xf32, #tpu.memory_space<vmem>>, vector<1x32xf32>
    %47 = vector.shape_cast %46 : vector<1x32xf32> to vector<1x1x32xf32>
    %48 = vector.broadcast %47 : vector<1x1x32xf32> to vector<1x16x32xf32>
    %49 = arith.addf %45, %48 : vector<1x16x32xf32>
    %cst_19 = arith.constant 2.000000e-01 : f32
    %50 = vector.broadcast %cst_19 : f32 to vector<1x16x32xf32>
    %51 = arith.mulf %50, %49 : vector<1x16x32xf32>
    %52 = arith.maximumf %49, %51 : vector<1x16x32xf32>
    %c0_20 = arith.constant 0 : index
    %c0_21 = arith.constant 0 : index
    %c0_22 = arith.constant 0 : index
    %53 = vector.load %arg5[%c0_20, %c0_21, %c0_22] : memref<1x16x32xf32, #tpu.memory_space<vmem>>, vector<1x16x32xf32>
    tpu.vector_store %arg5[%c0_20, %c0_21, %c0_22], %52 {strides = array<i32>} : memref<1x16x32xf32, #tpu.memory_space<vmem>>, vector<1x16x32xf32>,
    return
  }
  func.func @transform_0(%arg0: i32) -> (i32, i32, i32) {
    %c0_i32 = arith.constant 0 : i32
    %c0_i32_0 = arith.constant 0 : i32
    %c0_i32_1 = arith.constant 0 : i32
    return %arg0, %c0_i32, %c0_i32_0 : i32, i32, i32
  }
  func.func @transform_1(%arg0: i32) -> (i32, i32, i32) {
    %c0_i32 = arith.constant 0 : i32
    %c0_i32_0 = arith.constant 0 : i32
    %c0_i32_1 = arith.constant 0 : i32
    return %arg0, %c0_i32, %c0_i32_0 : i32, i32, i32
  }
  func.func @transform_2(%arg0: i32) -> (i32, i32, i32) {
    %c0_i32 = arith.constant 0 : i32
    %c0_i32_0 = arith.constant 0 : i32
    %c0_i32_1 = arith.constant 0 : i32
    %c0_i32_2 = arith.constant 0 : i32
    return %c0_i32, %c0_i32_0, %c0_i32_1 : i32, i32, i32
  }
  func.func @transform_3(%arg0: i32) -> (i32, i32) {
    %c0_i32 = arith.constant 0 : i32
    %c0_i32_0 = arith.constant 0 : i32
    %c0_i32_1 = arith.constant 0 : i32
    return %c0_i32, %c0_i32_0 : i32, i32
  }
  func.func @transform_4(%arg0: i32) -> (i32, i32, i32) {
    %c0_i32 = arith.constant 0 : i32
    %c0_i32_0 = arith.constant 0 : i32
    %c0_i32_1 = arith.constant 0 : i32
    return %arg0, %c0_i32, %c0_i32_0 : i32, i32, i32
  }
}

</mosaic_0001>

<llo_original>
// kernel: tpu_custom_call.1
$region0: #{tpu_custom_call.1}
  #allocation0 [shape = 'u32[]', space=smem, size = 0x4, offset = 0x4, fixed_abs, tag = 'smem constant byte address 0x4 - core index']
  #allocation1 [shape = 'u32[144,128]{1,0:T(1,128)}', space=vmem, size = 0x12000, scoped, tag = 'internal scratch']
  %s0 = inlined_call_operand.hbm [shape: f32[2,16,32], index: 0, kind: input, shape index: {}]
  %s1 = inlined_call_operand.vmem [shape: s32[2,1,1], index: 1, kind: input, shape index: {}]
  %s2 = inlined_call_operand.hbm [shape: f32[4,32,32], index: 2, kind: input, shape index: {}]
  %s3 = inlined_call_operand.vmem [shape: f32[1,32], index: 3, kind: input, shape index: {}]
  %s4 = inlined_call_operand.hbm [shape: f32[2,16,32], index: 4, kind: output, shape index: {}]
  %s5 = sld [smem:[#allocation0]]
  $region57: #{tpu_custom_call.1} parent=0
    _
  %s7 = ssub.s32 1, %s5
  %s8 = scalar_select 0, %s7, %s5
  $region1: #{tpu_custom_call.1} parent=0
    #allocation2 [shape = 'u8[16384]{0}', space=vmem, size = 0x4000, scoped, tag = 'input window, operand 0']
    #allocation3 [shape = 's32[2]{0}', space=sflag, size = 0x8, scoped, tag = 'scoped memory for tpu_custom_call.1']
    #allocation4 [shape = 's32[2]{0}', space=sflag, size = 0x8, scoped, tag = 'scoped memory for tpu_custom_call.1']
    #allocation5 [shape = 'u8[65536]{0}', space=vmem, size = 0x10000, scoped, tag = 'input window, operand 2, single buffered']
    #allocation6 [shape = 's32[1]{0}', space=sflag, size = 0x4, scoped, tag = 'scoped memory for tpu_custom_call.1']
    #allocation7 [shape = 'u8[16384]{0}', space=vmem, size = 0x4000, scoped, tag = 'output window, operand 0']
    %9 = vsyncpa [#allocation3], 0
    %s10 = scalar_lea.sflag [#allocation3], 1
    %11 = vsyncpa %s10, 0
    %12 = vsyncpa [#allocation6], 0
    %13 = vsyncpa [#allocation4], 0
    %s14 = scalar_lea.sflag [#allocation4], 1
    %15 = vsyncpa %s14, 0
    loop: start=0, step=1, limit=4
    $region2: #{tpu_custom_call.1} parent=1 // loop_pre_header
      _
    $region3: #{tpu_custom_call.1} parent=1 // loop_header
      %s17 = sphi 0, %s21
      %p18 = scmp.ge.s32.totalorder %s17, 4
      %s27 = sphi 0, %s29
      %s30 = sphi 0, %s27
      %s31 = sphi 0, %s30
      %s47 = sphi 0, %s31
      %s53 = sphi 0, %s55
      %s56 = sphi 0, %s53
      %s57 = sphi 0, %s56
      %s73 = sphi 0, %s57
      %s77 = sphi 0, %s77
      %s79 = sphi 0, %s77
      %s80 = sphi 0, %s79
      %s94 = sphi 0, %s80
      %s98 = sphi 0, %s98
      %s100 = sphi 0, %s98
      %s101 = sphi 0, %s100
      %s115 = sphi 0, %s101
      %s121 = sphi 0, %s123
      %s124 = sphi 0, %s121
      %s125 = sphi 0, %s124
      %s141 = sphi 0, %s125
    $region4: #{tpu_custom_call.1} parent=1 // loop_header_branch
      %20 = sbr.rel (%p18) target = $region8
    $region5: #{tpu_custom_call.1} parent=1 // loop_body
      %s22 = ssub.s32 %s17, 1
      %s23 = ssub.s32 %s17, 2
      %s24 = sadd.s32 %s17, 1
      %s25 = ssub.s32 %s17, %s24
      %p26 = scmp.eq.s32.totalorder %s25, 0
      %s28 = sadd.s32 %s27, 1
      %s29 = scalar_select %p26, %s27, %s28
      %p32 = pneg %p26
      %p33 = scmp.eq.s32.totalorder %s17, 1
      %p34 = por %p32, %p33
      %p35 = scmp.ne.s32.totalorder %s27, %s30
      %p36 = scmp.eq.s32.totalorder %s17, 0
      %p37 = por %p35, %p36
      %p38 = scmp.ne.s32.totalorder %s27, %s30
      %p39 = scmp.eq.s32.totalorder %s22, 1
      %p40 = por %p38, %p39
      %p41 = scmp.ne.s32.totalorder %s30, %s31
      %p42 = scmp.eq.s32.totalorder %s22, 0
      %p43 = por %p41, %p42
      %p44 = scmp.ne.s32.totalorder %s30, %s31
      %p45 = scmp.eq.s32.totalorder %s23, 1
      %p46 = por %p44, %p45
      %p48 = scmp.ne.s32.totalorder %s31, %s47
      %p49 = scmp.eq.s32.totalorder %s23, 0
      %p50 = por %p48, %p49
      %s51 = ssub.s32 %s17, %s24
      %p52 = scmp.eq.s32.totalorder %s51, 0
      %s54 = sadd.s32 %s53, 1
      %s55 = scalar_select %p52, %s53, %s54
      %p58 = pneg %p52
      %p59 = scmp.eq.s32.totalorder %s17, 1
      %p60 = por %p58, %p59
      %p61 = scmp.ne.s32.totalorder %s53, %s56
      %p62 = scmp.eq.s32.totalorder %s17, 0
      %p63 = por %p61, %p62
      %p64 = scmp.ne.s32.totalorder %s53, %s56
      %p65 = scmp.eq.s32.totalorder %s22, 1
      %p66 = por %p64, %p65
      %p67 = scmp.ne.s32.totalorder %s56, %s57
      %p68 = scmp.eq.s32.totalorder %s22, 0
      %p69 = por %p67, %p68
      %p70 = scmp.ne.s32.totalorder %s56, %s57
      %p71 = scmp.eq.s32.totalorder %s23, 1
      %p72 = por %p70, %p71
      %p74 = scmp.ne.s32.totalorder %s57, %s73
      %p75 = scmp.eq.s32.totalorder %s23, 0
      %p76 = por %p74, %p75
      %s78 = sadd.s32 %s77, 1
      %p81 = scmp.eq.s32.totalorder %s17, 1
      %p82 = scmp.ne.s32.totalorder %s77, %s79
      %p83 = scmp.eq.s32.totalorder %s17, 0
      %p84 = por %p82, %p83
      %p85 = scmp.ne.s32.totalorder %s77, %s79
      %p86 = scmp.eq.s32.totalorder %s22, 1
      %p87 = por %p85, %p86
      %p88 = scmp.ne.s32.totalorder %s79, %s80
      %p89 = scmp.eq.s32.totalorder %s22, 0
      %p90 = por %p88, %p89
      %p91 = scmp.ne.s32.totalorder %s79, %s80
      %p92 = scmp.eq.s32.totalorder %s23, 1
      %p93 = por %p91, %p92
      %p95 = scmp.ne.s32.totalorder %s80, %s94
      %p96 = scmp.eq.s32.totalorder %s23, 0
      %p97 = por %p95, %p96
      %s99 = sadd.s32 %s98, 1
      %p102 = scmp.eq.s32.totalorder %s17, 1
      %p103 = scmp.ne.s32.totalorder %s98, %s100
      %p104 = scmp.eq.s32.totalorder %s17, 0
      %p105 = por %p103, %p104
      %p106 = scmp.ne.s32.totalorder %s98, %s100
      %p107 = scmp.eq.s32.totalorder %s22, 1
      %p108 = por %p106, %p107
      %p109 = scmp.ne.s32.totalorder %s100, %s101
      %p110 = scmp.eq.s32.totalorder %s22, 0
      %p111 = por %p109, %p110
      %p112 = scmp.ne.s32.totalorder %s100, %s101
      %p113 = scmp.eq.s32.totalorder %s23, 1
      %p114 = por %p112, %p113
      %p116 = scmp.ne.s32.totalorder %s101, %s115
      %p117 = scmp.eq.s32.totalorder %s23, 0
      %p118 = por %p116, %p117
      %s119 = ssub.s32 %s17, %s24
      %p120 = scmp.eq.s32.totalorder %s119, 0
      %s122 = sadd.s32 %s121, 1
      %s123 = scalar_select %p120, %s121, %s122
      %p126 = pneg %p120
      %p127 = scmp.eq.s32.totalorder %s17, 1
      %p128 = por %p126, %p127
      %p129 = scmp.ne.s32.totalorder %s121, %s124
      %p130 = scmp.eq.s32.totalorder %s17, 0
      %p131 = por %p129, %p130
      %p132 = scmp.ne.s32.totalorder %s121, %s124
      %p133 = scmp.eq.s32.totalorder %s22, 1
      %p134 = por %p132, %p133
      %p135 = scmp.ne.s32.totalorder %s124, %s125
      %p136 = scmp.eq.s32.totalorder %s22, 0
      %p137 = por %p135, %p136
      %p138 = scmp.ne.s32.totalorder %s124, %s125
      %p139 = scmp.eq.s32.totalorder %s23, 1
      %p140 = por %p138, %p139
      %p142 = scmp.ne.s32.totalorder %s125, %s141
      %p143 = scmp.eq.s32.totalorder %s23, 0
      %p144 = por %p142, %p143
      %p145 = scmp.le.s32.totalorder 1, %s17
      %p146 = scmp.lt.s32.totalorder %s17, 3
      %p147 = pnand %p145, %p146
      %p148 = pneg %p147
      // Predicated region
      $region9: #{tpu_custom_call.1} parent=5 // pred_check
        _
      $region10: #{tpu_custom_call.1} parent=5 // pred_check_branch
        %150 = sbr.rel (%p147) target = $region12
      $region11: #{tpu_custom_call.1} parent=5 // pred_region
        %s151 = ssub.s32 %s17, 1
        // Predicated region
        $region13: #{tpu_custom_call.1} parent=11 // pred_check
          %p152 = pneg %p90
        $region14: #{tpu_custom_call.1} parent=11 // pred_check_branch
          %154 = sbr.rel (%p152) target = $region16
        $region15: #{tpu_custom_call.1} parent=11 // pred_region
          %s156 = ssub.s32 2048, 2048
          %157 = vsyncadd [#allocation6], %s156
          %s158 = sshll.u32 [#allocation5], 4
          %s159 = int_to_ptr.vmem [resolvable:$true] %s158
          %164 = dma.hbm_to_vmem [thread:$0]  %s2, 2048, %s159, [#allocation6], 128, 128, 8
        $region16: #{tpu_custom_call.1} parent=11 // pred_fallthru
          _
        // Predicated region
        $region17: #{tpu_custom_call.1} parent=11 // pred_check
          %p165 = pneg %p111
        $region18: #{tpu_custom_call.1} parent=11 // pred_check_branch
          %167 = sbr.rel (%p165) target = $region20
        $region19: #{tpu_custom_call.1} parent=11 // pred_region
          _
        $region20: #{tpu_custom_call.1} parent=11 // pred_fallthru
          _
      $region12: #{tpu_custom_call.1} parent=5 // pred_fallthru
        _
      %p168 = scmp.lt.s32.totalorder %s17, 2
      // Predicated region
      $region21: #{tpu_custom_call.1} parent=5 // pred_check
        %p169 = pneg %p168
      $region22: #{tpu_custom_call.1} parent=5 // pred_check_branch
        %171 = sbr.rel (%p169) target = $region24
      $region23: #{tpu_custom_call.1} parent=5 // pred_region
        // Predicated region
        $region25: #{tpu_custom_call.1} parent=23 // pred_check
          %p172 = pneg %p37
        $region26: #{tpu_custom_call.1} parent=23 // pred_check_branch
          %174 = sbr.rel (%p172) target = $region28
        $region27: #{tpu_custom_call.1} parent=23 // pred_region
          %s175 = sand.u32 %s27, 1
          %s176 = scalar_lea.sflag [#allocation3], %s175
          %s177 = sand.u32 %s27, 1
          %s178 = smul.addr %s177, 16
          %s179 = scalar_lea.vmem [#allocation2], %s178
          %s181 = ssub.s32 256, 256
          %182 = vsyncadd %s176, %s181
          %s183 = smul.addr %s17, 2
          %s184 = smul.addr %s183, 128
          %s185 = scalar_lea.hbm %s0, %s184
          %s186 = sshll.u32 %s179, 4
          %s187 = int_to_ptr.vmem [resolvable:$true] %s186
          %192 = dma.hbm_to_vmem [thread:$0]  %s185, 256, %s187, %s176, 128, 128, 8
        $region28: #{tpu_custom_call.1} parent=23 // pred_fallthru
          _
        // Predicated region
        $region29: #{tpu_custom_call.1} parent=23 // pred_check
          %p193 = pneg %p63
        $region30: #{tpu_custom_call.1} parent=23 // pred_check_branch
          %195 = sbr.rel (%p193) target = $region32
        $region31: #{tpu_custom_call.1} parent=23 // pred_region
          %p196 = scmp.lt.s32.totalorder %s17, 1
          %s197 = scalar_select %p196, %s17, 1
          %s198 = scalar_lea.vmem %s1, %s197
        $region32: #{tpu_custom_call.1} parent=23 // pred_fallthru
          _
      $region24: #{tpu_custom_call.1} parent=5 // pred_fallthru
        _
      %p199 = scmp.le.s32.totalorder 1, %s17
      %p200 = scmp.lt.s32.totalorder %s17, 3
      %p201 = pnand %p199, %p200
      %p202 = pneg %p201
      // Predicated region
      $region33: #{tpu_custom_call.1} parent=5 // pred_check
        _
      $region34: #{tpu_custom_call.1} parent=5 // pred_check_branch
        %204 = sbr.rel (%p201) target = $region36
      $region35: #{tpu_custom_call.1} parent=5 // pred_region
        %s205 = ssub.s32 %s17, 1
        %s206 = sand.u32 %s30, 1
        %s207 = scalar_lea.sflag [#allocation3], %s206
        %s208 = sand.u32 %s30, 1
        %s209 = smul.addr %s208, 16
        %s210 = scalar_lea.vmem [#allocation2], %s209
        // Predicated region
        $region37: #{tpu_custom_call.1} parent=35 // pred_check
          %p211 = pneg %p43
        $region38: #{tpu_custom_call.1} parent=35 // pred_check_branch
          %213 = sbr.rel (%p211) target = $region40
        $region39: #{tpu_custom_call.1} parent=35 // pred_region
          %214 = dma.done %s207, 256
        $region40: #{tpu_custom_call.1} parent=35 // pred_fallthru
          _
        // Predicated region
        $region41: #{tpu_custom_call.1} parent=35 // pred_check
          %p215 = pneg %p90
        $region42: #{tpu_custom_call.1} parent=35 // pred_check_branch
          %217 = sbr.rel (%p215) target = $region44
        $region43: #{tpu_custom_call.1} parent=35 // pred_region
          %218 = dma.done [#allocation6], 2048
        $region44: #{tpu_custom_call.1} parent=35 // pred_fallthru
          _
        %s219 = sand.u32 %s30, 1
        %s220 = scalar_lea.sflag [#allocation3], %s219
        %s221 = sand.u32 %s30, 1
        %s222 = smul.addr %s221, 16
        %s223 = scalar_lea.vmem [#allocation2], %s222
        %p224 = pneg %p43
        %p225 = pneg %p40
        %p226 = scmp.lt.s32.totalorder %s22, 1
        %s227 = scalar_select %p226, %s22, 1
        %s228 = scalar_lea.vmem %s1, %s227
        %p229 = pneg %p69
        %p230 = pneg %p66
        %p231 = pneg %p90
        %p232 = pneg %p87
        %p233 = pneg %p111
        %p234 = pneg %p108
        %p235 = pneg %p137
        %p236 = pneg %p134
        %s237 = sand.u32 %s124, 1
        %s238 = scalar_lea.sflag [#allocation4], %s237
        %s239 = sand.u32 %s124, 1
        %s240 = smul.addr %s239, 16
        %s241 = scalar_lea.vmem [#allocation7], %s240
        %p242 = scmp.lt.s32.totalorder %s22, 1
        %s243 = scalar_select %p242, %s22, 1
        %s244 = scalar_lea.vmem %s1, %s243
        %v245 = vld [vmem:[%s210] sm:$0xff]
        %v246 = vld [vmem:[%s210 + $0x8] sm:$0xff]
        %v247 = vld [vmem:[%s244] sm:$0x1]
        %v248 = vld [vmem:[#allocation5] sm:$0xff]
        %v249 = vld [vmem:[#allocation5 + $0x8] sm:$0xff]
        %v250 = vld [vmem:[#allocation5 + $0x10] sm:$0xff]
        %v251 = vld [vmem:[#allocation5 + $0x18] sm:$0xff]
        %vm252 = vcmask 261120
        %v254 = vsel %vm252, %v245, 0
        %v257 = vsel %vm252, %v246, 0
        %259 = vmatprep.subr.mxu0 0.0
        %260 = vmatpush1.msra.mxu0 %v248
        %261 = vmatprep.subr.mxu0 0.0
        %262 = vmatpush1.msra.mxu0 %v249
        %263 = vmatprep.subr.mxu0 0.0
        %264 = vmatpush1.msra.mxu0 %v250
        %265 = vmatprep.subr.mxu0 0.0
        %266 = vmatpush1.msra.mxu0 %v251
        %267 = vmatprep.subr.mxu0 0.0
        %268 = vmatpush1.msra.mxu0 0.0
        %269 = vmatprep.subr.mxu0 0.0
        %270 = vmatpush1.msra.mxu0 0.0
        %271 = vmatprep.subr.mxu0 0.0
        %272 = vmatpush1.msra.mxu0 0.0
        %273 = vmatprep.subr.mxu0 0.0
        %274 = vmatpush1.msra.mxu0 0.0
        %275 = vmatprep.subr.mxu0 0.0
        %276 = vmatpush1.msra.mxu0 0.0
        %277 = vmatprep.subr.mxu0 0.0
        %278 = vmatpush1.msra.mxu0 0.0
        %279 = vmatprep.subr.mxu0 0.0
        %280 = vmatpush1.msra.mxu0 0.0
        %281 = vmatprep.subr.mxu0 0.0
        %282 = vmatpush1.msra.mxu0 0.0
        %283 = vmatprep.subr.mxu0 0.0
        %284 = vmatpush1.msra.mxu0 0.0
        %285 = vmatprep.subr.mxu0 0.0
        %286 = vmatpush1.msra.mxu0 0.0
        %287 = vmatprep.subr.mxu0 0.0
        %288 = vmatpush1.msra.mxu0 0.0
        %289 = vmatprep.subr.mxu0 0.0
        %290 = vmatpush1.msra.mxu0 0.0
        %291 = vmatprep.subr.mxu0 0.0
        %292 = vmatpush1.msra.mxu0 0.0
        %293 = vmatprep.subr.mxu0 0.0
        %294 = vmatpush1.msra.mxu0 0.0
        %295 = vmatprep.subr.mxu0 0.0
        %296 = vmatpush1.msra.mxu0 0.0
        %297 = vmatprep.subr.mxu0 0.0
        %298 = vmatpush1.msra.mxu0 0.0
        %299 = vmatprep.subr.mxu0 0.0
        %300 = vmatpush1.msra.mxu0 0.0
        %301 = vmatprep.subr.mxu0 0.0
        %302 = vmatpush1.msra.mxu0 0.0
        %303 = vmatprep.subr.mxu0 0.0
        %304 = vmatpush1.msra.mxu0 0.0
        %305 = vmatprep.subr.mxu0 0.0
        %306 = vmatpush1.msra.mxu0 0.0
        %307 = vmatprep.subr.mxu0 0.0
        %308 = vmatpush1.msra.mxu0 0.0
        %309 = vmatprep.subr.mxu0 0.0
        %310 = vmatpush1.msra.mxu0 0.0
        %311 = vmatprep.subr.mxu0 0.0
        %312 = vmatpush1.msra.mxu0 0.0
        %313 = vmatprep.subr.mxu0 0.0
        %314 = vmatpush1.msra.mxu0 0.0
        %315 = vmatprep.subr.mxu0 0.0
        %316 = vmatpush1.msra.mxu0 0.0
        %317 = vmatprep.subr.mxu0 0.0
        %318 = vmatpush1.msra.mxu0 0.0
        %319 = vmatprep.subr.mxu0 0.0
        %320 = vmatpush1.msra.mxu0 0.0
        %321 = vmatprep.subr.mxu0 0.0
        %322 = vmatpush1.msra.mxu0 0.0
        %323 = vmatprep.mubr.f32.mxu0 0.0
        %324 = vmatmul.mubr.f32.gmra.mrb[0].mxu0 %v254
        %v325 = vpop.f32.mrb[0].mxu0
        %v326 = vadd.f32 0.0, %v325
        %v327 = vpop.f32.mrb[0].mxu0
        %328 = vmatprep.mubr.f32.mxu0 0.0
        %329 = vmatmul.mubr.f32.gmra.mrb[0].mxu0 %v257
        %v330 = vpop.f32.mrb[0].mxu0
        %v331 = vadd.f32 0.0, %v330
        %v332 = vpop.f32.mrb[0].mxu0
        %333 = vdwg.mxu0
        %vm334 = vcmp.eq.s32.totalorder %v247, 0
        %v335 = vsel %vm334, 1, 0
        %v336 = vcvt.s32.f32 %v335
        %v338 = vlaneseq
        %v339 = vshrl.u32 %v338, 7
        %v340 = vsub.s32 0, %v339
        %v341 = vrot.slane %v336, %v340
        %342 = vset.pattern.permute.xlu0 0
        %343 = vperm.xlu0 %342, %v341
        %v344 = vpop.permute.xlu0 %343
        %v346 = vmul.f32 %v344, %v326
        %v347 = vmul.f32 %v344, %v331
        %s348 = scalar_lea.vmem [#allocation5], 32
        %v349 = vld [vmem:[%s348] sm:$0xff]
        %v350 = vld [vmem:[%s348 + $0x8] sm:$0xff]
        %v351 = vld [vmem:[%s348 + $0x10] sm:$0xff]
        %v352 = vld [vmem:[%s348 + $0x18] sm:$0xff]
        %353 = vmatprep.subr.mxu0 0.0
        %354 = vmatpush1.msra.mxu0 %v349
        %355 = vmatprep.subr.mxu0 0.0
        %356 = vmatpush1.msra.mxu0 %v350
        %357 = vmatprep.subr.mxu0 0.0
        %358 = vmatpush1.msra.mxu0 %v351
        %359 = vmatprep.subr.mxu0 0.0
        %360 = vmatpush1.msra.mxu0 %v352
        %361 = vmatprep.subr.mxu0 0.0
        %362 = vmatpush1.msra.mxu0 0.0
        %363 = vmatprep.subr.mxu0 0.0
        %364 = vmatpush1.msra.mxu0 0.0
        %365 = vmatprep.subr.mxu0 0.0
        %366 = vmatpush1.msra.mxu0 0.0
        %367 = vmatprep.subr.mxu0 0.0
        %368 = vmatpush1.msra.mxu0 0.0
        %369 = vmatprep.subr.mxu0 0.0
        %370 = vmatpush1.msra.mxu0 0.0
        %371 = vmatprep.subr.mxu0 0.0
        %372 = vmatpush1.msra.mxu0 0.0
        %373 = vmatprep.subr.mxu0 0.0
        %374 = vmatpush1.msra.mxu0 0.0
        %375 = vmatprep.subr.mxu0 0.0
        %376 = vmatpush1.msra.mxu0 0.0
        %377 = vmatprep.subr.mxu0 0.0
        %378 = vmatpush1.msra.mxu0 0.0
        %379 = vmatprep.subr.mxu0 0.0
        %380 = vmatpush1.msra.mxu0 0.0
        %381 = vmatprep.subr.mxu0 0.0
        %382 = vmatpush1.msra.mxu0 0.0
        %383 = vmatprep.subr.mxu0 0.0
        %384 = vmatpush1.msra.mxu0 0.0
        %385 = vmatprep.subr.mxu0 0.0
        %386 = vmatpush1.msra.mxu0 0.0
        %387 = vmatprep.subr.mxu0 0.0
        %388 = vmatpush1.msra.mxu0 0.0
        %389 = vmatprep.subr.mxu0 0.0
        %390 = vmatpush1.msra.mxu0 0.0
        %391 = vmatprep.subr.mxu0 0.0
        %392 = vmatpush1.msra.mxu0 0.0
        %393 = vmatprep.subr.mxu0 0.0
        %394 = vmatpush1.msra.mxu0 0.0
        %395 = vmatprep.subr.mxu0 0.0
        %396 = vmatpush1.msra.mxu0 0.0
        %397 = vmatprep.subr.mxu0 0.0
        %398 = vmatpush1.msra.mxu0 0.0
        %399 = vmatprep.subr.mxu0 0.0
        %400 = vmatpush1.msra.mxu0 0.0
        %401 = vmatprep.subr.mxu0 0.0
        %402 = vmatpush1.msra.mxu0 0.0
        %403 = vmatprep.subr.mxu0 0.0
        %404 = vmatpush1.msra.mxu0 0.0
        %405 = vmatprep.subr.mxu0 0.0
        %406 = vmatpush1.msra.mxu0 0.0
        %407 = vmatprep.subr.mxu0 0.0
        %408 = vmatpush1.msra.mxu0 0.0
        %409 = vmatprep.subr.mxu0 0.0
        %410 = vmatpush1.msra.mxu0 0.0
        %411 = vmatprep.subr.mxu0 0.0
        %412 = vmatpush1.msra.mxu0 0.0
        %413 = vmatprep.subr.mxu0 0.0
        %414 = vmatpush1.msra.mxu0 0.0
        %415 = vmatprep.subr.mxu0 0.0
        %416 = vmatpush1.msra.mxu0 0.0
        %417 = vmatprep.mubr.f32.mxu0 0.0
        %418 = vmatmul.mubr.f32.gmra.mrb[0].mxu0 %v254
        %v419 = vpop.f32.mrb[0].mxu0
        %v420 = vadd.f32 0.0, %v419
        %v421 = vpop.f32.mrb[0].mxu0
        %422 = vmatprep.mubr.f32.mxu0 0.0
        %423 = vmatmul.mubr.f32.gmra.mrb[0].mxu0 %v257
        %v424 = vpop.f32.mrb[0].mxu0
        %v425 = vadd.f32 0.0, %v424
        %v426 = vpop.f32.mrb[0].mxu0
        %427 = vdwg.mxu0
        %vm428 = vcmp.eq.s32.totalorder %v247, 1
        %v429 = vsel %vm428, 1, 0
        %v430 = vcvt.s32.f32 %v429
        %v432 = vlaneseq
        %v433 = vshrl.u32 %v432, 7
        %v434 = vsub.s32 0, %v433
        %v435 = vrot.slane %v430, %v434
        %436 = vset.pattern.permute.xlu0 0
        %437 = vperm.xlu0 %436, %v435
        %v438 = vpop.permute.xlu0 %437
        %v440 = vmul.f32 %v438, %v420
        %v441 = vmul.f32 %v438, %v425
        %v442 = vadd.f32 %v346, %v440
        %v443 = vadd.f32 %v347, %v441
        %s444 = scalar_lea.vmem [#allocation5], 64
        %v445 = vld [vmem:[%s444] sm:$0xff]
        %v446 = vld [vmem:[%s444 + $0x8] sm:$0xff]
        %v447 = vld [vmem:[%s444 + $0x10] sm:$0xff]
        %v448 = vld [vmem:[%s444 + $0x18] sm:$0xff]
        %449 = vmatprep.subr.mxu0 0.0
        %450 = vmatpush1.msra.mxu0 %v445
        %451 = vmatprep.subr.mxu0 0.0
        %452 = vmatpush1.msra.mxu0 %v446
        %453 = vmatprep.subr.mxu0 0.0
        %454 = vmatpush1.msra.mxu0 %v447
        %455 = vmatprep.subr.mxu0 0.0
        %456 = vmatpush1.msra.mxu0 %v448
        %457 = vmatprep.subr.mxu0 0.0
        %458 = vmatpush1.msra.mxu0 0.0
        %459 = vmatprep.subr.mxu0 0.0
        %460 = vmatpush1.msra.mxu0 0.0
        %461 = vmatprep.subr.mxu0 0.0
        %462 = vmatpush1.msra.mxu0 0.0
        %463 = vmatprep.subr.mxu0 0.0
        %464 = vmatpush1.msra.mxu0 0.0
        %465 = vmatprep.subr.mxu0 0.0
        %466 = vmatpush1.msra.mxu0 0.0
        %467 = vmatprep.subr.mxu0 0.0
        %468 = vmatpush1.msra.mxu0 0.0
        %469 = vmatprep.subr.mxu0 0.0
        %470 = vmatpush1.msra.mxu0 0.0
        %471 = vmatprep.subr.mxu0 0.0
        %472 = vmatpush1.msra.mxu0 0.0
        %473 = vmatprep.subr.mxu0 0.0
        %474 = vmatpush1.msra.mxu0 0.0
        %475 = vmatprep.subr.mxu0 0.0
        %476 = vmatpush1.msra.mxu0 0.0
        %477 = vmatprep.subr.mxu0 0.0
        %478 = vmatpush1.msra.mxu0 0.0
        %479 = vmatprep.subr.mxu0 0.0
        %480 = vmatpush1.msra.mxu0 0.0
        %481 = vmatprep.subr.mxu0 0.0
        %482 = vmatpush1.msra.mxu0 0.0
        %483 = vmatprep.subr.mxu0 0.0
        %484 = vmatpush1.msra.mxu0 0.0
        %485 = vmatprep.subr.mxu0 0.0
        %486 = vmatpush1.msra.mxu0 0.0
        %487 = vmatprep.subr.mxu0 0.0
        %488 = vmatpush1.msra.mxu0 0.0
        %489 = vmatprep.subr.mxu0 0.0
        %490 = vmatpush1.msra.mxu0 0.0
        %491 = vmatprep.subr.mxu0 0.0
        %492 = vmatpush1.msra.mxu0 0.0
        %493 = vmatprep.subr.mxu0 0.0
        %494 = vmatpush1.msra.mxu0 0.0
        %495 = vmatprep.subr.mxu0 0.0
        %496 = vmatpush1.msra.mxu0 0.0
        %497 = vmatprep.subr.mxu0 0.0
        %498 = vmatpush1.msra.mxu0 0.0
        %499 = vmatprep.subr.mxu0 0.0
        %500 = vmatpush1.msra.mxu0 0.0
        %501 = vmatprep.subr.mxu0 0.0
        %502 = vmatpush1.msra.mxu0 0.0
        %503 = vmatprep.subr.mxu0 0.0
        %504 = vmatpush1.msra.mxu0 0.0
        %505 = vmatprep.subr.mxu0 0.0
        %506 = vmatpush1.msra.mxu0 0.0
        %507 = vmatprep.subr.mxu0 0.0
        %508 = vmatpush1.msra.mxu0 0.0
        %509 = vmatprep.subr.mxu0 0.0
        %510 = vmatpush1.msra.mxu0 0.0
        %511 = vmatprep.subr.mxu0 0.0
        %512 = vmatpush1.msra.mxu0 0.0
        %513 = vmatprep.mubr.f32.mxu0 0.0
        %514 = vmatmul.mubr.f32.gmra.mrb[0].mxu0 %v254
        %v515 = vpop.f32.mrb[0].mxu0
        %v516 = vadd.f32 0.0, %v515
        %v517 = vpop.f32.mrb[0].mxu0
        %518 = vmatprep.mubr.f32.mxu0 0.0
        %519 = vmatmul.mubr.f32.gmra.mrb[0].mxu0 %v257
        %v520 = vpop.f32.mrb[0].mxu0
        %v521 = vadd.f32 0.0, %v520
        %v522 = vpop.f32.mrb[0].mxu0
        %523 = vdwg.mxu0
        %vm524 = vcmp.eq.s32.totalorder %v247, 2
        %v525 = vsel %vm524, 1, 0
        %v526 = vcvt.s32.f32 %v525
        %v528 = vlaneseq
        %v529 = vshrl.u32 %v528, 7
        %v530 = vsub.s32 0, %v529
        %v531 = vrot.slane %v526, %v530
        %532 = vset.pattern.permute.xlu0 0
        %533 = vperm.xlu0 %532, %v531
        %v534 = vpop.permute.xlu0 %533
        %v536 = vmul.f32 %v534, %v516
        %v537 = vmul.f32 %v534, %v521
        %v538 = vadd.f32 %v442, %v536
        %v539 = vadd.f32 %v443, %v537
        %s540 = scalar_lea.vmem [#allocation5], 96
        %v541 = vld [vmem:[%s540] sm:$0xff]
        %v542 = vld [vmem:[%s540 + $0x8] sm:$0xff]
        %v543 = vld [vmem:[%s540 + $0x10] sm:$0xff]
        %v544 = vld [vmem:[%s540 + $0x18] sm:$0xff]
        %545 = vmatprep.subr.mxu0 0.0
        %546 = vmatpush1.msra.mxu0 %v541
        %547 = vmatprep.subr.mxu0 0.0
        %548 = vmatpush1.msra.mxu0 %v542
        %549 = vmatprep.subr.mxu0 0.0
        %550 = vmatpush1.msra.mxu0 %v543
        %551 = vmatprep.subr.mxu0 0.0
        %552 = vmatpush1.msra.mxu0 %v544
        %553 = vmatprep.subr.mxu0 0.0
        %554 = vmatpush1.msra.mxu0 0.0
        %555 = vmatprep.subr.mxu0 0.0
        %556 = vmatpush1.msra.mxu0 0.0
        %557 = vmatprep.subr.mxu0 0.0
        %558 = vmatpush1.msra.mxu0 0.0
        %559 = vmatprep.subr.mxu0 0.0
        %560 = vmatpush1.msra.mxu0 0.0
        %561 = vmatprep.subr.mxu0 0.0
        %562 = vmatpush1.msra.mxu0 0.0
        %563 = vmatprep.subr.mxu0 0.0
        %564 = vmatpush1.msra.mxu0 0.0
        %565 = vmatprep.subr.mxu0 0.0
        %566 = vmatpush1.msra.mxu0 0.0
        %567 = vmatprep.subr.mxu0 0.0
        %568 = vmatpush1.msra.mxu0 0.0
        %569 = vmatprep.subr.mxu0 0.0
        %570 = vmatpush1.msra.mxu0 0.0
        %571 = vmatprep.subr.mxu0 0.0
        %572 = vmatpush1.msra.mxu0 0.0
        %573 = vmatprep.subr.mxu0 0.0
        %574 = vmatpush1.msra.mxu0 0.0
        %575 = vmatprep.subr.mxu0 0.0
        %576 = vmatpush1.msra.mxu0 0.0
        %577 = vmatprep.subr.mxu0 0.0
        %578 = vmatpush1.msra.mxu0 0.0
        %579 = vmatprep.subr.mxu0 0.0
        %580 = vmatpush1.msra.mxu0 0.0
        %581 = vmatprep.subr.mxu0 0.0
        %582 = vmatpush1.msra.mxu0 0.0
        %583 = vmatprep.subr.mxu0 0.0
        %584 = vmatpush1.msra.mxu0 0.0
        %585 = vmatprep.subr.mxu0 0.0
        %586 = vmatpush1.msra.mxu0 0.0
        %587 = vmatprep.subr.mxu0 0.0
        %588 = vmatpush1.msra.mxu0 0.0
        %589 = vmatprep.subr.mxu0 0.0
        %590 = vmatpush1.msra.mxu0 0.0
        %591 = vmatprep.subr.mxu0 0.0
        %592 = vmatpush1.msra.mxu0 0.0
        %593 = vmatprep.subr.mxu0 0.0
        %594 = vmatpush1.msra.mxu0 0.0
        %595 = vmatprep.subr.mxu0 0.0
        %596 = vmatpush1.msra.mxu0 0.0
        %597 = vmatprep.subr.mxu0 0.0
        %598 = vmatpush1.msra.mxu0 0.0
        %599 = vmatprep.subr.mxu0 0.0
        %600 = vmatpush1.msra.mxu0 0.0
        %601 = vmatprep.subr.mxu0 0.0
        %602 = vmatpush1.msra.mxu0 0.0
        %603 = vmatprep.subr.mxu0 0.0
        %604 = vmatpush1.msra.mxu0 0.0
        %605 = vmatprep.subr.mxu0 0.0
        %606 = vmatpush1.msra.mxu0 0.0
        %607 = vmatprep.subr.mxu0 0.0
        %608 = vmatpush1.msra.mxu0 0.0
        %609 = vmatprep.mubr.f32.mxu0 0.0
        %610 = vmatmul.mubr.f32.gmra.mrb[0].mxu0 %v254
        %v611 = vpop.f32.mrb[0].mxu0
        %v612 = vadd.f32 0.0, %v611
        %v613 = vpop.f32.mrb[0].mxu0
        %614 = vmatprep.mubr.f32.mxu0 0.0
        %615 = vmatmul.mubr.f32.gmra.mrb[0].mxu0 %v257
        %v616 = vpop.f32.mrb[0].mxu0
        %v617 = vadd.f32 0.0, %v616
        %v618 = vpop.f32.mrb[0].mxu0
        %619 = vdwg.mxu0
        %vm620 = vcmp.eq.s32.totalorder %v247, 3
        %v621 = vsel %vm620, 1, 0
        %v622 = vcvt.s32.f32 %v621
        %v624 = vlaneseq
        %v625 = vshrl.u32 %v624, 7
        %v626 = vsub.s32 0, %v625
        %v627 = vrot.slane %v622, %v626
        %628 = vset.pattern.permute.xlu0 0
        %629 = vperm.xlu0 %628, %v627
        %v630 = vpop.permute.xlu0 %629
        %v632 = vmul.f32 %v630, %v612
        %v633 = vmul.f32 %v630, %v617
        %v634 = vadd.f32 %v538, %v632
        %v635 = vadd.f32 %v539, %v633
        %v636 = vld [vmem:[%s3] sm:$0x1]
        %v638 = vlaneseq
        %v639 = vshrl.u32 %v638, 7
        %v640 = vsub.s32 0, %v639
        %v641 = vrot.slane %v636, %v640
        %v643 = vadd.f32 %v634, %v641
        %v644 = vadd.f32 %v635, %v641
        %v645 = vmul.f32 %v643, 0.2
        %v646 = vmul.f32 %v644, 0.2
        %v647 = vmax.f32 %v643, %v645
        %v648 = vmax.f32 %v644, %v646
        %649 = vst.msk [vmem:[%s241] sm:$0xff] %vm252, %v647
        %650 = vst.msk [vmem:[%s241 + $0x8] sm:$0xff] %vm252, %v648
        %s651 = sand.u32 %s124, 1
        %s652 = scalar_lea.sflag [#allocation4], %s651
        %s653 = sand.u32 %s124, 1
        %s654 = smul.addr %s653, 16
        %s655 = scalar_lea.vmem [#allocation7], %s654
        // Predicated region
        $region45: #{tpu_custom_call.1} parent=35 // pred_check
          %p656 = pneg %p134
        $region46: #{tpu_custom_call.1} parent=35 // pred_check_branch
          %658 = sbr.rel (%p656) target = $region48
        $region47: #{tpu_custom_call.1} parent=35 // pred_region
          %s660 = ssub.s32 256, 256
          %661 = vsyncadd %s652, %s660
          %s662 = smul.addr %s22, 2
          %s663 = smul.addr %s662, 128
          %s664 = scalar_lea.hbm %s4, %s663
          %s665 = sshll.u32 %s655, 4
          %s666 = int_to_ptr.vmem [resolvable:$true] %s665
          %671 = dma.vmem_to_hbm [thread:$0]  %s666, 256, %s664, %s652, 128, 128, 8
        $region48: #{tpu_custom_call.1} parent=35 // pred_fallthru
          _
      $region36: #{tpu_custom_call.1} parent=5 // pred_fallthru
        _
      %p672 = scmp.le.s32.totalorder 2, %s17
      // Predicated region
      $region49: #{tpu_custom_call.1} parent=5 // pred_check
        %p673 = pneg %p672
      $region50: #{tpu_custom_call.1} parent=5 // pred_check_branch
        %675 = sbr.rel (%p673) target = $region52
      $region51: #{tpu_custom_call.1} parent=5 // pred_region
        %s676 = ssub.s32 %s17, 2
        // Predicated region
        $region53: #{tpu_custom_call.1} parent=51 // pred_check
          %p677 = pneg %p140
        $region54: #{tpu_custom_call.1} parent=51 // pred_check_branch
          %679 = sbr.rel (%p677) target = $region56
        $region55: #{tpu_custom_call.1} parent=51 // pred_region
          %s680 = sand.u32 %s125, 1
          %s681 = scalar_lea.sflag [#allocation4], %s680
          %s682 = sand.u32 %s125, 1
          %s683 = smul.addr %s682, 16
          %s684 = scalar_lea.vmem [#allocation7], %s683
          %685 = dma.done %s681, 256
        $region56: #{tpu_custom_call.1} parent=51 // pred_fallthru
          _
      $region52: #{tpu_custom_call.1} parent=5 // pred_fallthru
        _
    $region6: #{tpu_custom_call.1} parent=1 // loop_footer
      %s21 = sadd.s32 1, %s17
    $region7: #{tpu_custom_call.1} parent=1 // loop_footer_branch
      %16 = sbr.rel target = $region3
    $region8: #{tpu_custom_call.1} parent=1 // loop_exit
      _
    %686 = vsyncpa [#allocation3], 1
    %s687 = scalar_lea.sflag [#allocation3], 1
    %688 = vsyncpa %s687, 1
    %689 = vsyncpa [#allocation6], 1
    %690 = vsyncpa [#allocation4], 1
    %s691 = scalar_lea.sflag [#allocation4], 1
    %692 = vsyncpa %s691, 1

</llo_original>
